<compile_context>
chip_gen: v7x
topology: tpu7x:2x2x1
jax: 0.10.0
libtpu: 0.0.40
codegen_flags: <defaults>
</compile_context>

<pallas_src>
import functools

import jax
import jax.numpy as jnp
from jax.experimental import pallas as pl
from jax.experimental.pallas import tpu as pltpu


# ----------------------------------------------------------------------------
# Pallas kernel
# ----------------------------------------------------------------------------
def _channel_attention_kernel(x_ref, w1_ref, b1_ref, w2_ref, b2_ref, o_ref, *, inv_hw):
    """Fused channel attention for one image.

    x_ref : (1, C, HW)   activation, HW on the lane axis
    w1_ref: (Ch, C)      first Linear weight (torch layout: out x in)
    b1_ref: (Ch, 1)      first Linear bias (column)
    w2_ref: (C, Ch)      second Linear weight
    b2_ref: (C, 1)       second Linear bias (column)
    o_ref : (1, C, HW)   x * sigmoid(attention)
    """
    x = x_ref[0]                                               # (C, HW), input dtype
    xf = x.astype(jnp.float32)

    # Adaptive avg / max pool over the spatial (lane) axis -> per-channel columns.
    avg = jnp.sum(xf, axis=-1, keepdims=True) * inv_hw         # (C, 1) f32
    mx = jnp.max(xf, axis=-1, keepdims=True)                   # (C, 1) f32

    w1 = w1_ref[...].astype(jnp.float32)                       # (Ch, C)
    b1 = b1_ref[...].astype(jnp.float32)                       # (Ch, 1)
    w2 = w2_ref[...].astype(jnp.float32)                       # (C, Ch)
    b2 = b2_ref[...].astype(jnp.float32)                       # (C, 1)

    # Shared MLP applied to both pooled vectors (column-major, no transposes).
    h_avg = jnp.maximum(
        jnp.dot(w1, avg, preferred_element_type=jnp.float32) + b1, 0.0)   # (Ch, 1)
    h_max = jnp.maximum(
        jnp.dot(w1, mx, preferred_element_type=jnp.float32) + b1, 0.0)    # (Ch, 1)

    # MLP(avg) + MLP(max) = W2 @ (h_avg + h_max) + 2*b2
    logits = jnp.dot(w2, h_avg + h_max,
                     preferred_element_type=jnp.float32) + 2.0 * b2       # (C, 1)

    scale = 1.0 / (1.0 + jnp.exp(-logits))                     # sigmoid (EUP), (C, 1)

    # Broadcast the per-channel scale along the lane (spatial) axis.
    o_ref[0] = (xf * scale).astype(o_ref.dtype)                # (C, HW)


# ----------------------------------------------------------------------------
# Wrapper
# ----------------------------------------------------------------------------
def channel_attention(x, w1, b1, w2, b2):
    """x: (B, C, H, W) NCHW (torch layout).  Returns same shape/dtype."""
    B, C, H, W = x.shape
    HW = H * W
    Ch = w1.shape[0]
    # TODO(synk): for very large H*W (per-image tile > VMEM) the spatial axis would
    # need an extra grid dimension with a two-pass (pool, then scale) pipeline.

    x2 = x.reshape(B, C, HW)                                   # pure reshape, no copy
    kernel = functools.partial(_channel_attention_kernel, inv_hw=1.0 / HW)

    y = pl.pallas_call(
        kernel,
        out_shape=jax.ShapeDtypeStruct((B, C, HW), x.dtype),
        grid=(B,),
        in_specs=[
            pl.BlockSpec((1, C, HW), lambda b: (b, 0, 0)),     # activation tile
            pl.BlockSpec((Ch, C), lambda b: (0, 0)),           # small weights: full arrays
            pl.BlockSpec((Ch, 1), lambda b: (0, 0)),
            pl.BlockSpec((C, Ch), lambda b: (0, 0)),
            pl.BlockSpec((C, 1), lambda b: (0, 0)),
        ],
        out_specs=pl.BlockSpec((1, C, HW), lambda b: (b, 0, 0)),
        compiler_params=pltpu.CompilerParams(
            dimension_semantics=("parallel",)),
    )(x2, w1, b1.reshape(Ch, 1), w2, b2.reshape(C, 1))

    return y.reshape(B, C, H, W)


# ----------------------------------------------------------------------------
# Pure-JAX reference (mirrors the PyTorch module, eval semantics)
# ----------------------------------------------------------------------------
def channel_attention_ref(x, w1, b1, w2, b2):
    avg = jnp.mean(x, axis=(2, 3))                             # (B, C)
    mx = jnp.max(x, axis=(2, 3))                               # (B, C)

    def mlp(p):
        h = jnp.maximum(p @ w1.T + b1, 0.0)
        return h @ w2.T + b2

    out = mlp(avg) + mlp(mx)                                   # (B, C)
    scale = jax.nn.sigmoid(out)[:, :, None, None]
    return x * scale


# ----------------------------------------------------------------------------
# Main
# ----------------------------------------------------------------------------
if __name__ == "__main__":
    B, C, H, W = 2, 64, 16, 16
    reduction_ratio = 16
    Ch = C // reduction_ratio                                  # 4

    key = jax.random.PRNGKey(0)
    kx, k1, k2, k3, k4 = jax.random.split(key, 5)

    x = jax.random.normal(kx, (B, C, H, W), jnp.float32)

    # torch nn.Linear default init: U(-1/sqrt(fan_in), 1/sqrt(fan_in))
    lim1 = 1.0 / (C ** 0.5)
    w1 = jax.random.uniform(k1, (Ch, C), jnp.float32, -lim1, lim1)
    b1 = jax.random.uniform(k2, (Ch,), jnp.float32, -lim1, lim1)
    lim2 = 1.0 / (Ch ** 0.5)
    w2 = jax.random.uniform(k3, (C, Ch), jnp.float32, -lim2, lim2)
    b2 = jax.random.uniform(k4, (C,), jnp.float32, -lim2, lim2)

    fwd = jax.jit(channel_attention)
    out = jax.block_until_ready(fwd(x, w1, b1, w2, b2))

    ref = channel_attention_ref(x, w1, b1, w2, b2)
    assert out.shape == (B, C, H, W), out.shape
    assert bool(jnp.all(jnp.isfinite(out)))
    assert bool(jnp.allclose(out, ref, atol=1e-5, rtol=1e-5)), \
        float(jnp.max(jnp.abs(out - ref)))

    print("KERNEL_OK")
</pallas_src>

<mosaic_0001>
module attributes {stable_mosaic.version = 11 : i64} {
  func.func @_channel_attention_kernel(%arg0: i32, %arg1: memref<1x64x256xf32, #tpu.memory_space<vmem>>, %arg2: memref<4x64xf32, #tpu.memory_space<vmem>>, %arg3: memref<4x1xf32, #tpu.memory_space<vmem>>, %arg4: memref<64x4xf32, #tpu.memory_space<vmem>>, %arg5: memref<64x1xf32, #tpu.memory_space<vmem>>, %arg6: memref<1x64x256xf32, #tpu.memory_space<vmem>>) attributes {dimension_semantics = [#tpu.dimension_semantics<parallel>], iteration_bounds = array<i64: 2>, scalar_prefetch = 0 : i64, scratch_operands = 0 : i64, tpu.core_type = #tpu.core_type<tc>, window_params = [{transform_indices = @transform_0, window_bounds = array<i64: 1, 64, 256>}, {pipeline_mode = #tpu.pipeline_mode<synchronous>, transform_indices = @transform_1, window_bounds = array<i64: 4, 64>}, {pipeline_mode = #tpu.pipeline_mode<synchronous>, transform_indices = @transform_2, window_bounds = array<i64: 4, 1>}, {pipeline_mode = #tpu.pipeline_mode<synchronous>, transform_indices = @transform_3, window_bounds = array<i64: 64, 4>}, {pipeline_mode = #tpu.pipeline_mode<synchronous>, transform_indices = @transform_4, window_bounds = array<i64: 64, 1>}, {transform_indices = @transform_5, window_bounds = array<i64: 1, 64, 256>}]} {
    %c0 = arith.constant 0 : index
    %c0_0 = arith.constant 0 : index
    %c0_1 = arith.constant 0 : index
    %0 = vector.load %arg1[%c0, %c0_0, %c0_1] : memref<1x64x256xf32, #tpu.memory_space<vmem>>, vector<1x64x256xf32>
    %1 = vector.shape_cast %0 : vector<1x64x256xf32> to vector<64x256xf32>
    %cst = arith.constant dense<0.000000e+00> : vector<64xf32>
    %2 = vector.multi_reduction <add>, %1, %cst [1] : vector<64x256xf32> to vector<64xf32>
    %3 = vector.shape_cast %2 : vector<64xf32> to vector<64x1xf32>
    %cst_2 = arith.constant 3.906250e-03 : f32
    %4 = vector.broadcast %cst_2 : f32 to vector<64x1xf32>
    %5 = arith.mulf %3, %4 : vector<64x1xf32>
    %cst_3 = arith.constant dense<0xFF800000> : vector<64xf32>
    %6 = vector.multi_reduction <maximumf>, %1, %cst_3 [1] : vector<64x256xf32> to vector<64xf32>
    %7 = vector.shape_cast %6 : vector<64xf32> to vector<64x1xf32>
    %c0_4 = arith.constant 0 : index
    %c0_5 = arith.constant 0 : index
    %8 = vector.load %arg2[%c0_4, %c0_5] : memref<4x64xf32, #tpu.memory_space<vmem>>, vector<4x64xf32>
    %c0_6 = arith.constant 0 : index
    %c0_7 = arith.constant 0 : index
    %9 = vector.load %arg3[%c0_6, %c0_7] : memref<4x1xf32, #tpu.memory_space<vmem>>, vector<4x1xf32>
    %c0_8 = arith.constant 0 : index
    %c0_9 = arith.constant 0 : index
    %10 = vector.load %arg4[%c0_8, %c0_9] : memref<64x4xf32, #tpu.memory_space<vmem>>, vector<64x4xf32>
    %c0_10 = arith.constant 0 : index
    %c0_11 = arith.constant 0 : index
    %11 = vector.load %arg5[%c0_10, %c0_11] : memref<64x1xf32, #tpu.memory_space<vmem>>, vector<64x1xf32>
    %cst_12 = arith.constant dense<0.000000e+00> : vector<4x1xf32>
    %12 = tpu.matmul %8, %5, %cst_12 {dimension_numbers = #tpu.dot_dimension_numbers<[1], [0], [0], [1], [0, 0, 1, 1], [], []>} : vector<4x64xf32>, vector<64x1xf32>, vector<4x1xf32> -> vector<4x1xf32>
    %13 = arith.addf %12, %9 : vector<4x1xf32>
    %cst_13 = arith.constant 0.000000e+00 : f32
    %14 = vector.broadcast %cst_13 : f32 to vector<4x1xf32>
    %15 = arith.maximumf %13, %14 : vector<4x1xf32>
    %cst_14 = arith.constant dense<0.000000e+00> : vector<4x1xf32>
    %16 = tpu.matmul %8, %7, %cst_14 {dimension_numbers = #tpu.dot_dimension_numbers<[1], [0], [0], [1], [0, 0, 1, 1], [], []>} : vector<4x64xf32>, vector<64x1xf32>, vector<4x1xf32> -> vector<4x1xf32>
    %17 = arith.addf %16, %9 : vector<4x1xf32>
    %cst_15 = arith.constant 0.000000e+00 : f32
    %18 = vector.broadcast %cst_15 : f32 to vector<4x1xf32>
    %19 = arith.maximumf %17, %18 : vector<4x1xf32>
    %20 = arith.addf %15, %19 : vector<4x1xf32>
    %cst_16 = arith.constant dense<0.000000e+00> : vector<64x1xf32>
    %21 = tpu.matmul %10, %20, %cst_16 {dimension_numbers = #tpu.dot_dimension_numbers<[1], [0], [0], [1], [0, 0, 1, 1], [], []>} : vector<64x4xf32>, vector<4x1xf32>, vector<64x1xf32> -> vector<64x1xf32>
    %cst_17 = arith.constant 2.000000e+00 : f32
    %22 = vector.broadcast %cst_17 : f32 to vector<64x1xf32>
    %23 = arith.mulf %22, %11 : vector<64x1xf32>
    %24 = arith.addf %21, %23 : vector<64x1xf32>
    %cst_18 = arith.constant 0.000000e+00 : f32
    %25 = vector.broadcast %cst_18 : f32 to vector<64x1xf32>
    %26 = arith.subf %25, %24 : vector<64x1xf32>
    %27 = math.exp %26 : vector<64x1xf32>
    %cst_19 = arith.constant 1.000000e+00 : f32
    %28 = vector.broadcast %cst_19 : f32 to vector<64x1xf32>
    %29 = arith.addf %28, %27 : vector<64x1xf32>
    %cst_20 = arith.constant 1.000000e+00 : f32
    %30 = vector.broadcast %cst_20 : f32 to vector<64x1xf32>
    %31 = arith.divf %30, %29 : vector<64x1xf32>
    %32 = vector.broadcast %31 : vector<64x1xf32> to vector<64x256xf32>
    %33 = arith.mulf %1, %32 : vector<64x256xf32>
    %c0_21 = arith.constant 0 : index
    %c0_22 = arith.constant 0 : index
    %c0_23 = arith.constant 0 : index
    %34 = vector.load %arg6[%c0_21, %c0_22, %c0_23] : memref<1x64x256xf32, #tpu.memory_space<vmem>>, vector<1x64x256xf32>
    %35 = vector.shape_cast %34 : vector<1x64x256xf32> to vector<64x256xf32>
    %36 = vector.shape_cast %33 : vector<64x256xf32> to vector<1x64x256xf32>
    tpu.vector_store %arg6[%c0_21, %c0_22, %c0_23], %36 {strides = array<i32>} : memref<1x64x256xf32, #tpu.memory_space<vmem>>, vector<1x64x256xf32>,
    return
  }
  func.func @transform_0(%arg0: i32) -> (i32, i32, i32) {
    %c0_i32 = arith.constant 0 : i32
    %c0_i32_0 = arith.constant 0 : i32
    %c0_i32_1 = arith.constant 0 : i32
    return %arg0, %c0_i32, %c0_i32_0 : i32, i32, i32
  }
  func.func @transform_1(%arg0: i32) -> (i32, i32) {
    %c0_i32 = arith.constant 0 : i32
    %c0_i32_0 = arith.constant 0 : i32
    %c0_i32_1 = arith.constant 0 : i32
    return %c0_i32, %c0_i32_0 : i32, i32
  }
  func.func @transform_2(%arg0: i32) -> (i32, i32) {
    %c0_i32 = arith.constant 0 : i32
    %c0_i32_0 = arith.constant 0 : i32
    %c0_i32_1 = arith.constant 0 : i32
    return %c0_i32, %c0_i32_0 : i32, i32
  }
  func.func @transform_3(%arg0: i32) -> (i32, i32) {
    %c0_i32 = arith.constant 0 : i32
    %c0_i32_0 = arith.constant 0 : i32
    %c0_i32_1 = arith.constant 0 : i32
    return %c0_i32, %c0_i32_0 : i32, i32
  }
  func.func @transform_4(%arg0: i32) -> (i32, i32) {
    %c0_i32 = arith.constant 0 : i32
    %c0_i32_0 = arith.constant 0 : i32
    %c0_i32_1 = arith.constant 0 : i32
    return %c0_i32, %c0_i32_0 : i32, i32
  }
  func.func @transform_5(%arg0: i32) -> (i32, i32, i32) {
    %c0_i32 = arith.constant 0 : i32
    %c0_i32_0 = arith.constant 0 : i32
    %c0_i32_1 = arith.constant 0 : i32
    return %arg0, %c0_i32, %c0_i32_0 : i32, i32, i32
  }
}

</mosaic_0001>

<llo_original>
// kernel: channel_attention.1
$region0: #{channel_attention.1}
  #allocation0 [shape = 'u32[]', space=smem, size = 0x4, offset = 0x4, fixed_abs, tag = 'smem constant byte address 0x4 - core index']
  #allocation1 [shape = 'u32[144,128]{1,0:T(1,128)}', space=vmem, size = 0x12000, scoped, tag = 'internal scratch']
  %s0 = inlined_call_operand.vmem [shape: f32[2,64,256], index: 0, kind: input, shape index: {}]
  %s1 = inlined_call_operand.vmem [shape: f32[4,64], index: 1, kind: input, shape index: {}]
  %s2 = inlined_call_operand.vmem [shape: f32[4,1], index: 2, kind: input, shape index: {}]
  %s3 = inlined_call_operand.vmem [shape: f32[64,4], index: 3, kind: input, shape index: {}]
  %s4 = inlined_call_operand.vmem [shape: f32[64,1], index: 4, kind: input, shape index: {}]
  %s5 = inlined_call_operand.vmem [shape: f32[2,64,256], index: 5, kind: output, shape index: {}]
  %s6 = sld [smem:[#allocation0]]
  $region53: #{channel_attention.1} parent=0
    _
  %s8 = ssub.s32 1, %s6
  %s9 = scalar_select 0, %s8, %s6
  loop: start=0, step=1, limit=4
  $region2: #{channel_attention.1} parent=0 // loop_pre_header
    _
  $region3: #{channel_attention.1} parent=0 // loop_header
    %s11 = sphi 0, %s15
    %p12 = scmp.ge.s32.totalorder %s11, 4
    %s21 = sphi 0, %s23
    %s24 = sphi 0, %s21
    %s25 = sphi 0, %s24
    %s41 = sphi 0, %s25
    %s45 = sphi 0, %s45
    %s47 = sphi 0, %s45
    %s48 = sphi 0, %s47
    %s62 = sphi 0, %s48
    %s66 = sphi 0, %s66
    %s68 = sphi 0, %s66
    %s69 = sphi 0, %s68
    %s83 = sphi 0, %s69
    %s87 = sphi 0, %s87
    %s89 = sphi 0, %s87
    %s90 = sphi 0, %s89
    %s104 = sphi 0, %s90
    %s108 = sphi 0, %s108
    %s110 = sphi 0, %s108
    %s111 = sphi 0, %s110
    %s125 = sphi 0, %s111
    %s131 = sphi 0, %s133
    %s134 = sphi 0, %s131
    %s135 = sphi 0, %s134
    %s151 = sphi 0, %s135
  $region4: #{channel_attention.1} parent=0 // loop_header_branch
    %14 = sbr.rel (%p12) target = $region8
  $region5: #{channel_attention.1} parent=0 // loop_body
    %s16 = ssub.s32 %s11, 1
    %s17 = ssub.s32 %s11, 2
    %s18 = sadd.s32 %s11, 1
    %s19 = ssub.s32 %s11, %s18
    %p20 = scmp.eq.s32.totalorder %s19, 0
    %s22 = sadd.s32 %s21, 1
    %s23 = scalar_select %p20, %s21, %s22
    %p26 = pneg %p20
    %p27 = scmp.eq.s32.totalorder %s11, 1
    %p28 = por %p26, %p27
    %p29 = scmp.ne.s32.totalorder %s21, %s24
    %p30 = scmp.eq.s32.totalorder %s11, 0
    %p31 = por %p29, %p30
    %p32 = scmp.ne.s32.totalorder %s21, %s24
    %p33 = scmp.eq.s32.totalorder %s16, 1
    %p34 = por %p32, %p33
    %p35 = scmp.ne.s32.totalorder %s24, %s25
    %p36 = scmp.eq.s32.totalorder %s16, 0
    %p37 = por %p35, %p36
    %p38 = scmp.ne.s32.totalorder %s24, %s25
    %p39 = scmp.eq.s32.totalorder %s17, 1
    %p40 = por %p38, %p39
    %p42 = scmp.ne.s32.totalorder %s25, %s41
    %p43 = scmp.eq.s32.totalorder %s17, 0
    %p44 = por %p42, %p43
    %s46 = sadd.s32 %s45, 1
    %p49 = scmp.eq.s32.totalorder %s11, 1
    %p50 = scmp.ne.s32.totalorder %s45, %s47
    %p51 = scmp.eq.s32.totalorder %s11, 0
    %p52 = por %p50, %p51
    %p53 = scmp.ne.s32.totalorder %s45, %s47
    %p54 = scmp.eq.s32.totalorder %s16, 1
    %p55 = por %p53, %p54
    %p56 = scmp.ne.s32.totalorder %s47, %s48
    %p57 = scmp.eq.s32.totalorder %s16, 0
    %p58 = por %p56, %p57
    %p59 = scmp.ne.s32.totalorder %s47, %s48
    %p60 = scmp.eq.s32.totalorder %s17, 1
    %p61 = por %p59, %p60
    %p63 = scmp.ne.s32.totalorder %s48, %s62
    %p64 = scmp.eq.s32.totalorder %s17, 0
    %p65 = por %p63, %p64
    %s67 = sadd.s32 %s66, 1
    %p70 = scmp.eq.s32.totalorder %s11, 1
    %p71 = scmp.ne.s32.totalorder %s66, %s68
    %p72 = scmp.eq.s32.totalorder %s11, 0
    %p73 = por %p71, %p72
    %p74 = scmp.ne.s32.totalorder %s66, %s68
    %p75 = scmp.eq.s32.totalorder %s16, 1
    %p76 = por %p74, %p75
    %p77 = scmp.ne.s32.totalorder %s68, %s69
    %p78 = scmp.eq.s32.totalorder %s16, 0
    %p79 = por %p77, %p78
    %p80 = scmp.ne.s32.totalorder %s68, %s69
    %p81 = scmp.eq.s32.totalorder %s17, 1
    %p82 = por %p80, %p81
    %p84 = scmp.ne.s32.totalorder %s69, %s83
    %p85 = scmp.eq.s32.totalorder %s17, 0
    %p86 = por %p84, %p85
    %s88 = sadd.s32 %s87, 1
    %p91 = scmp.eq.s32.totalorder %s11, 1
    %p92 = scmp.ne.s32.totalorder %s87, %s89
    %p93 = scmp.eq.s32.totalorder %s11, 0
    %p94 = por %p92, %p93
    %p95 = scmp.ne.s32.totalorder %s87, %s89
    %p96 = scmp.eq.s32.totalorder %s16, 1
    %p97 = por %p95, %p96
    %p98 = scmp.ne.s32.totalorder %s89, %s90
    %p99 = scmp.eq.s32.totalorder %s16, 0
    %p100 = por %p98, %p99
    %p101 = scmp.ne.s32.totalorder %s89, %s90
    %p102 = scmp.eq.s32.totalorder %s17, 1
    %p103 = por %p101, %p102
    %p105 = scmp.ne.s32.totalorder %s90, %s104
    %p106 = scmp.eq.s32.totalorder %s17, 0
    %p107 = por %p105, %p106
    %s109 = sadd.s32 %s108, 1
    %p112 = scmp.eq.s32.totalorder %s11, 1
    %p113 = scmp.ne.s32.totalorder %s108, %s110
    %p114 = scmp.eq.s32.totalorder %s11, 0
    %p115 = por %p113, %p114
    %p116 = scmp.ne.s32.totalorder %s108, %s110
    %p117 = scmp.eq.s32.totalorder %s16, 1
    %p118 = por %p116, %p117
    %p119 = scmp.ne.s32.totalorder %s110, %s111
    %p120 = scmp.eq.s32.totalorder %s16, 0
    %p121 = por %p119, %p120
    %p122 = scmp.ne.s32.totalorder %s110, %s111
    %p123 = scmp.eq.s32.totalorder %s17, 1
    %p124 = por %p122, %p123
    %p126 = scmp.ne.s32.totalorder %s111, %s125
    %p127 = scmp.eq.s32.totalorder %s17, 0
    %p128 = por %p126, %p127
    %s129 = ssub.s32 %s11, %s18
    %p130 = scmp.eq.s32.totalorder %s129, 0
    %s132 = sadd.s32 %s131, 1
    %s133 = scalar_select %p130, %s131, %s132
    %p136 = pneg %p130
    %p137 = scmp.eq.s32.totalorder %s11, 1
    %p138 = por %p136, %p137
    %p139 = scmp.ne.s32.totalorder %s131, %s134
    %p140 = scmp.eq.s32.totalorder %s11, 0
    %p141 = por %p139, %p140
    %p142 = scmp.ne.s32.totalorder %s131, %s134
    %p143 = scmp.eq.s32.totalorder %s16, 1
    %p144 = por %p142, %p143
    %p145 = scmp.ne.s32.totalorder %s134, %s135
    %p146 = scmp.eq.s32.totalorder %s16, 0
    %p147 = por %p145, %p146
    %p148 = scmp.ne.s32.totalorder %s134, %s135
    %p149 = scmp.eq.s32.totalorder %s17, 1
    %p150 = por %p148, %p149
    %p152 = scmp.ne.s32.totalorder %s135, %s151
    %p153 = scmp.eq.s32.totalorder %s17, 0
    %p154 = por %p152, %p153
    %p155 = scmp.le.s32.totalorder 1, %s11
    %p156 = scmp.lt.s32.totalorder %s11, 3
    %p157 = pnand %p155, %p156
    %p158 = pneg %p157
    // Predicated region
    $region9: #{channel_attention.1} parent=5 // pred_check
      _
    $region10: #{channel_attention.1} parent=5 // pred_check_branch
      %160 = sbr.rel (%p157) target = $region12
    $region11: #{channel_attention.1} parent=5 // pred_region
      %s161 = ssub.s32 %s11, 1
      // Predicated region
      $region13: #{channel_attention.1} parent=11 // pred_check
        %p162 = pneg %p58
      $region14: #{channel_attention.1} parent=11 // pred_check_branch
        %164 = sbr.rel (%p162) target = $region16
      $region15: #{channel_attention.1} parent=11 // pred_region
        _
      $region16: #{channel_attention.1} parent=11 // pred_fallthru
        _
      // Predicated region
      $region17: #{channel_attention.1} parent=11 // pred_check
        %p165 = pneg %p79
      $region18: #{channel_attention.1} parent=11 // pred_check_branch
        %167 = sbr.rel (%p165) target = $region20
      $region19: #{channel_attention.1} parent=11 // pred_region
        _
      $region20: #{channel_attention.1} parent=11 // pred_fallthru
        _
      // Predicated region
      $region21: #{channel_attention.1} parent=11 // pred_check
        %p168 = pneg %p100
      $region22: #{channel_attention.1} parent=11 // pred_check_branch
        %170 = sbr.rel (%p168) target = $region24
      $region23: #{channel_attention.1} parent=11 // pred_region
        _
      $region24: #{channel_attention.1} parent=11 // pred_fallthru
        _
      // Predicated region
      $region25: #{channel_attention.1} parent=11 // pred_check
        %p171 = pneg %p121
      $region26: #{channel_attention.1} parent=11 // pred_check_branch
        %173 = sbr.rel (%p171) target = $region28
      $region27: #{channel_attention.1} parent=11 // pred_region
        _
      $region28: #{channel_attention.1} parent=11 // pred_fallthru
        _
    $region12: #{channel_attention.1} parent=5 // pred_fallthru
      _
    %p174 = scmp.lt.s32.totalorder %s11, 2
    // Predicated region
    $region29: #{channel_attention.1} parent=5 // pred_check
      %p175 = pneg %p174
    $region30: #{channel_attention.1} parent=5 // pred_check_branch
      %177 = sbr.rel (%p175) target = $region32
    $region31: #{channel_attention.1} parent=5 // pred_region
      // Predicated region
      $region33: #{channel_attention.1} parent=31 // pred_check
        %p178 = pneg %p31
      $region34: #{channel_attention.1} parent=31 // pred_check_branch
        %180 = sbr.rel (%p178) target = $region36
      $region35: #{channel_attention.1} parent=31 // pred_region
        %p181 = scmp.lt.s32.totalorder %s11, 1
        %s182 = scalar_select %p181, %s11, 1
        %s183 = smul.addr %s182, 16
        %s184 = smul.addr %s183, 8
        %s185 = scalar_lea.vmem %s0, %s184
      $region36: #{channel_attention.1} parent=31 // pred_fallthru
        _
    $region32: #{channel_attention.1} parent=5 // pred_fallthru
      _
    %p186 = scmp.le.s32.totalorder 1, %s11
    %p187 = scmp.lt.s32.totalorder %s11, 3
    %p188 = pnand %p186, %p187
    %p189 = pneg %p188
    // Predicated region
    $region37: #{channel_attention.1} parent=5 // pred_check
      _
    $region38: #{channel_attention.1} parent=5 // pred_check_branch
      %191 = sbr.rel (%p188) target = $region40
    $region39: #{channel_attention.1} parent=5 // pred_region
      %s192 = ssub.s32 %s11, 1
      %p193 = scmp.lt.s32.totalorder %s16, 1
      %s194 = scalar_select %p193, %s16, 1
      %s195 = smul.addr %s194, 16
      %s196 = smul.addr %s195, 8
      %s197 = scalar_lea.vmem %s0, %s196
      %p198 = pneg %p37
      %p199 = pneg %p34
      %p200 = pneg %p58
      %p201 = pneg %p55
      %p202 = pneg %p79
      %p203 = pneg %p76
      %p204 = pneg %p100
      %p205 = pneg %p97
      %p206 = pneg %p121
      %p207 = pneg %p118
      %p208 = pneg %p147
      %p209 = pneg %p144
      %p210 = scmp.lt.s32.totalorder %s16, 1
      %s211 = scalar_select %p210, %s16, 1
      %s212 = smul.addr %s211, 16
      %s213 = smul.addr %s212, 8
      %s214 = scalar_lea.vmem %s5, %s213
      %p215 = scmp.lt.s32.totalorder %s16, 1
      %s216 = scalar_select %p215, %s16, 1
      %s217 = smul.addr %s216, 16
      %s218 = smul.addr %s217, 8
      %s219 = scalar_lea.vmem %s0, %s218
      %p220 = scmp.lt.s32.totalorder %s16, 1
      %s221 = scalar_select %p220, %s16, 1
      %s222 = smul.addr %s221, 16
      %s223 = smul.addr %s222, 8
      %s224 = scalar_lea.vmem %s5, %s223
      %v225 = vld [vmem:[%s219] sm:$0xff]
      %v226 = vld [vmem:[%s219 + $0x8] sm:$0xff]
      %v227 = vld [vmem:[%s219 + $0x10] sm:$0xff]
      %v228 = vld [vmem:[%s219 + $0x18] sm:$0xff]
      %v229 = vld [vmem:[%s219 + $0x20] sm:$0xff]
      %v230 = vld [vmem:[%s219 + $0x28] sm:$0xff]
      %v231 = vld [vmem:[%s219 + $0x30] sm:$0xff]
      %v232 = vld [vmem:[%s219 + $0x38] sm:$0xff]
      %v233 = vld [vmem:[%s219 + $0x40] sm:$0xff]
      %v234 = vld [vmem:[%s219 + $0x48] sm:$0xff]
      %v235 = vld [vmem:[%s219 + $0x50] sm:$0xff]
      %v236 = vld [vmem:[%s219 + $0x58] sm:$0xff]
      %v237 = vld [vmem:[%s219 + $0x60] sm:$0xff]
      %v238 = vld [vmem:[%s219 + $0x68] sm:$0xff]
      %v239 = vld [vmem:[%s219 + $0x70] sm:$0xff]
      %v240 = vld [vmem:[%s219 + $0x78] sm:$0xff]
      %v241 = vadd.f32 %v225, %v226
      %242 = vadd.xlane.f32.xlu0 %v241
      %v243 = vpop.xlane.xlu0 %242
      %v244 = vadd.f32 %v227, %v228
      %245 = vadd.xlane.f32.xlu0 %v244
      %v246 = vpop.xlane.xlu0 %245
      %v247 = vadd.f32 %v229, %v230
      %248 = vadd.xlane.f32.xlu0 %v247
      %v249 = vpop.xlane.xlu0 %248
      %v250 = vadd.f32 %v231, %v232
      %251 = vadd.xlane.f32.xlu0 %v250
      %v252 = vpop.xlane.xlu0 %251
      %v253 = vadd.f32 %v233, %v234
      %254 = vadd.xlane.f32.xlu0 %v253
      %v255 = vpop.xlane.xlu0 %254
      %v256 = vadd.f32 %v235, %v236
      %257 = vadd.xlane.f32.xlu0 %v256
      %v258 = vpop.xlane.xlu0 %257
      %v259 = vadd.f32 %v237, %v238
      %260 = vadd.xlane.f32.xlu0 %v259
      %v261 = vpop.xlane.xlu0 %260
      %v262 = vadd.f32 %v239, %v240
      %263 = vadd.xlane.f32.xlu0 %v262
      %v264 = vpop.xlane.xlu0 %263
      %v265 = vmul.f32 %v243, 0.00390625
      %v266 = vmul.f32 %v246, 0.00390625
      %v267 = vmul.f32 %v249, 0.00390625
      %v268 = vmul.f32 %v252, 0.00390625
      %v269 = vmul.f32 %v255, 0.00390625
      %v270 = vmul.f32 %v258, 0.00390625
      %v271 = vmul.f32 %v261, 0.00390625
      %v272 = vmul.f32 %v264, 0.00390625
      %v273 = vmax.f32 %v225, %v226
      %274 = vmax.xlane.f32.xlu0 %v273
      %v275 = vpop.xlane.xlu0 %274
      %v276 = vmax.f32 %v227, %v228
      %277 = vmax.xlane.f32.xlu0 %v276
      %v278 = vpop.xlane.xlu0 %277
      %v279 = vmax.f32 %v229, %v230
      %280 = vmax.xlane.f32.xlu0 %v279
      %v281 = vpop.xlane.xlu0 %280
      %v282 = vmax.f32 %v231, %v232
      %283 = vmax.xlane.f32.xlu0 %v282
      %v284 = vpop.xlane.xlu0 %283
      %v285 = vmax.f32 %v233, %v234
      %286 = vmax.xlane.f32.xlu0 %v285
      %v287 = vpop.xlane.xlu0 %286
      %v288 = vmax.f32 %v235, %v236
      %289 = vmax.xlane.f32.xlu0 %v288
      %v290 = vpop.xlane.xlu0 %289
      %v291 = vmax.f32 %v237, %v238
      %292 = vmax.xlane.f32.xlu0 %v291
      %v293 = vpop.xlane.xlu0 %292
      %v294 = vmax.f32 %v239, %v240
      %295 = vmax.xlane.f32.xlu0 %v294
      %v296 = vpop.xlane.xlu0 %295
      %v297 = vld [vmem:[%s1] sm:$0xf]
      %v298 = vld [vmem:[%s2] sm:$0xf]
      %v299 = vld [vmem:[%s3] sm:$0xff]
      %v300 = vld [vmem:[%s3 + $0x8] sm:$0xff]
      %v301 = vld [vmem:[%s3 + $0x10] sm:$0xff]
      %v302 = vld [vmem:[%s3 + $0x18] sm:$0xff]
      %v303 = vld [vmem:[%s3 + $0x20] sm:$0xff]
      %v304 = vld [vmem:[%s3 + $0x28] sm:$0xff]
      %v305 = vld [vmem:[%s3 + $0x30] sm:$0xff]
      %v306 = vld [vmem:[%s3 + $0x38] sm:$0xff]
      %v307 = vld [vmem:[%s4] sm:$0xff]
      %v308 = vld [vmem:[%s4 + $0x8] sm:$0xff]
      %v309 = vld [vmem:[%s4 + $0x10] sm:$0xff]
      %v310 = vld [vmem:[%s4 + $0x18] sm:$0xff]
      %v311 = vld [vmem:[%s4 + $0x20] sm:$0xff]
      %v312 = vld [vmem:[%s4 + $0x28] sm:$0xff]
      %v313 = vld [vmem:[%s4 + $0x30] sm:$0xff]
      %v314 = vld [vmem:[%s4 + $0x38] sm:$0xff]
      %vm315 = vcmask 523264
      %v317 = vsel %vm315, %v297, 0
      %319 = vmatprep.subr.mxu0 0.0
      %320 = vmatpush1.msra.mxu0 %v265
      %321 = vmatprep.subr.mxu0 0.0
      %322 = vmatpush1.msra.mxu0 %v266
      %323 = vmatprep.subr.mxu0 0.0
      %324 = vmatpush1.msra.mxu0 %v267
      %325 = vmatprep.subr.mxu0 0.0
      %326 = vmatpush1.msra.mxu0 %v268
      %327 = vmatprep.subr.mxu0 0.0
      %328 = vmatpush1.msra.mxu0 %v269
      %329 = vmatprep.subr.mxu0 0.0
      %330 = vmatpush1.msra.mxu0 %v270
      %331 = vmatprep.subr.mxu0 0.0
      %332 = vmatpush1.msra.mxu0 %v271
      %333 = vmatprep.subr.mxu0 0.0
      %334 = vmatpush1.msra.mxu0 %v272
      %335 = vmatprep.subr.mxu0 0.0
      %336 = vmatpush1.msra.mxu0 0.0
      %337 = vmatprep.subr.mxu0 0.0
      %338 = vmatpush1.msra.mxu0 0.0
      %339 = vmatprep.subr.mxu0 0.0
      %340 = vmatpush1.msra.mxu0 0.0
      %341 = vmatprep.subr.mxu0 0.0
      %342 = vmatpush1.msra.mxu0 0.0
      %343 = vmatprep.subr.mxu0 0.0
      %344 = vmatpush1.msra.mxu0 0.0
      %345 = vmatprep.subr.mxu0 0.0
      %346 = vmatpush1.msra.mxu0 0.0
      %347 = vmatprep.subr.mxu0 0.0
      %348 = vmatpush1.msra.mxu0 0.0
      %349 = vmatprep.subr.mxu0 0.0
      %350 = vmatpush1.msra.mxu0 0.0
      %351 = vmatprep.subr.mxu0 0.0
      %352 = vmatpush1.msra.mxu0 0.0
      %353 = vmatprep.subr.mxu0 0.0
      %354 = vmatpush1.msra.mxu0 0.0
      %355 = vmatprep.subr.mxu0 0.0
      %356 = vmatpush1.msra.mxu0 0.0
      %357 = vmatprep.subr.mxu0 0.0
      %358 = vmatpush1.msra.mxu0 0.0
      %359 = vmatprep.subr.mxu0 0.0
      %360 = vmatpush1.msra.mxu0 0.0
      %361 = vmatprep.subr.mxu0 0.0
      %362 = vmatpush1.msra.mxu0 0.0
      %363 = vmatprep.subr.mxu0 0.0
      %364 = vmatpush1.msra.mxu0 0.0
      %365 = vmatprep.subr.mxu0 0.0
      %366 = vmatpush1.msra.mxu0 0.0
      %367 = vmatprep.subr.mxu0 0.0
      %368 = vmatpush1.msra.mxu0 0.0
      %369 = vmatprep.subr.mxu0 0.0
      %370 = vmatpush1.msra.mxu0 0.0
      %371 = vmatprep.subr.mxu0 0.0
      %372 = vmatpush1.msra.mxu0 0.0
      %373 = vmatprep.subr.mxu0 0.0
      %374 = vmatpush1.msra.mxu0 0.0
      %375 = vmatprep.subr.mxu0 0.0
      %376 = vmatpush1.msra.mxu0 0.0
      %377 = vmatprep.subr.mxu0 0.0
      %378 = vmatpush1.msra.mxu0 0.0
      %379 = vmatprep.subr.mxu0 0.0
      %380 = vmatpush1.msra.mxu0 0.0
      %381 = vmatprep.subr.mxu0 0.0
      %382 = vmatpush1.msra.mxu0 0.0
      %383 = vmatprep.mubr.f32.mxu0 0.0
      %384 = vmatmul.mubr.f32.gmra.mrb[0].mxu0 %v317
      %v385 = vpop.f32.mrb[0].mxu0
      %v386 = vadd.f32 %v298, %v385
      %v387 = vpop.f32.mrb[0].mxu0
      %388 = vdwg.mxu0
      %v389 = vmax.f32 %v386, 0.0
      %390 = vmatprep.subr.mxu0 0.0
      %391 = vmatpush1.msra.mxu0 %v275
      %392 = vmatprep.subr.mxu0 0.0
      %393 = vmatpush1.msra.mxu0 %v278
      %394 = vmatprep.subr.mxu0 0.0
      %395 = vmatpush1.msra.mxu0 %v281
      %396 = vmatprep.subr.mxu0 0.0
      %397 = vmatpush1.msra.mxu0 %v284
      %398 = vmatprep.subr.mxu0 0.0
      %399 = vmatpush1.msra.mxu0 %v287
      %400 = vmatprep.subr.mxu0 0.0
      %401 = vmatpush1.msra.mxu0 %v290
      %402 = vmatprep.subr.mxu0 0.0
      %403 = vmatpush1.msra.mxu0 %v293
      %404 = vmatprep.subr.mxu0 0.0
      %405 = vmatpush1.msra.mxu0 %v296
      %406 = vmatprep.subr.mxu0 0.0
      %407 = vmatpush1.msra.mxu0 0.0
      %408 = vmatprep.subr.mxu0 0.0
      %409 = vmatpush1.msra.mxu0 0.0
      %410 = vmatprep.subr.mxu0 0.0
      %411 = vmatpush1.msra.mxu0 0.0
      %412 = vmatprep.subr.mxu0 0.0
      %413 = vmatpush1.msra.mxu0 0.0
      %414 = vmatprep.subr.mxu0 0.0
      %415 = vmatpush1.msra.mxu0 0.0
      %416 = vmatprep.subr.mxu0 0.0
      %417 = vmatpush1.msra.mxu0 0.0
      %418 = vmatprep.subr.mxu0 0.0
      %419 = vmatpush1.msra.mxu0 0.0
      %420 = vmatprep.subr.mxu0 0.0
      %421 = vmatpush1.msra.mxu0 0.0
      %422 = vmatprep.subr.mxu0 0.0
      %423 = vmatpush1.msra.mxu0 0.0
      %424 = vmatprep.subr.mxu0 0.0
      %425 = vmatpush1.msra.mxu0 0.0
      %426 = vmatprep.subr.mxu0 0.0
      %427 = vmatpush1.msra.mxu0 0.0
      %428 = vmatprep.subr.mxu0 0.0
      %429 = vmatpush1.msra.mxu0 0.0
      %430 = vmatprep.subr.mxu0 0.0
      %431 = vmatpush1.msra.mxu0 0.0
      %432 = vmatprep.subr.mxu0 0.0
      %433 = vmatpush1.msra.mxu0 0.0
      %434 = vmatprep.subr.mxu0 0.0
      %435 = vmatpush1.msra.mxu0 0.0
      %436 = vmatprep.subr.mxu0 0.0
      %437 = vmatpush1.msra.mxu0 0.0
      %438 = vmatprep.subr.mxu0 0.0
      %439 = vmatpush1.msra.mxu0 0.0
      %440 = vmatprep.subr.mxu0 0.0
      %441 = vmatpush1.msra.mxu0 0.0
      %442 = vmatprep.subr.mxu0 0.0
      %443 = vmatpush1.msra.mxu0 0.0
      %444 = vmatprep.subr.mxu0 0.0
      %445 = vmatpush1.msra.mxu0 0.0
      %446 = vmatprep.subr.mxu0 0.0
      %447 = vmatpush1.msra.mxu0 0.0
      %448 = vmatprep.subr.mxu0 0.0
      %449 = vmatpush1.msra.mxu0 0.0
      %450 = vmatprep.subr.mxu0 0.0
      %451 = vmatpush1.msra.mxu0 0.0
      %452 = vmatprep.subr.mxu0 0.0
      %453 = vmatpush1.msra.mxu0 0.0
      %454 = vmatprep.mubr.f32.mxu0 0.0
      %455 = vmatmul.mubr.f32.gmra.mrb[0].mxu0 %v317
      %v456 = vpop.f32.mrb[0].mxu0
      %v457 = vadd.f32 %v298, %v456
      %v458 = vpop.f32.mrb[0].mxu0
      %459 = vdwg.mxu0
      %v460 = vmax.f32 %v457, 0.0
      %v461 = vadd.f32 %v389, %v460
      %v462 = vmul.f32 %v307, 2.0
      %v463 = vmul.f32 %v308, 2.0
      %v464 = vmul.f32 %v309, 2.0
      %v465 = vmul.f32 %v310, 2.0
      %v466 = vmul.f32 %v311, 2.0
      %v467 = vmul.f32 %v312, 2.0
      %v468 = vmul.f32 %v313, 2.0
      %v469 = vmul.f32 %v314, 2.0
      %vm470 = vcmask 31744
      %v472 = vsel %vm470, %v299, 0
      %v475 = vsel %vm470, %v300, 0
      %v478 = vsel %vm470, %v301, 0
      %v481 = vsel %vm470, %v302, 0
      %v484 = vsel %vm470, %v303, 0
      %v487 = vsel %vm470, %v304, 0
      %v490 = vsel %vm470, %v305, 0
      %v493 = vsel %vm470, %v306, 0
      %vm495 = vcmask 1043456
      %v497 = vsel %vm495, %v461, 0
      %499 = vmatprep.subr.mxu0 0.0
      %500 = vmatpush1.msra.mxu0 %v497
      %501 = vmatprep.subr.mxu0 0.0
      %502 = vmatpush1.msra.mxu0 0.0
      %503 = vmatprep.subr.mxu0 0.0
      %504 = vmatpush1.msra.mxu0 0.0
      %505 = vmatprep.subr.mxu0 0.0
      %506 = vmatpush1.msra.mxu0 0.0
      %507 = vmatprep.subr.mxu0 0.0
      %508 = vmatpush1.msra.mxu0 0.0
      %509 = vmatprep.subr.mxu0 0.0
      %510 = vmatpush1.msra.mxu0 0.0
      %511 = vmatprep.subr.mxu0 0.0
      %512 = vmatpush1.msra.mxu0 0.0
      %513 = vmatprep.subr.mxu0 0.0
      %514 = vmatpush1.msra.mxu0 0.0
      %515 = vmatprep.subr.mxu0 0.0
      %516 = vmatpush1.msra.mxu0 0.0
      %517 = vmatprep.subr.mxu0 0.0
      %518 = vmatpush1.msra.mxu0 0.0
      %519 = vmatprep.subr.mxu0 0.0
      %520 = vmatpush1.msra.mxu0 0.0
      %521 = vmatprep.subr.mxu0 0.0
      %522 = vmatpush1.msra.mxu0 0.0
      %523 = vmatprep.subr.mxu0 0.0
      %524 = vmatpush1.msra.mxu0 0.0
      %525 = vmatprep.subr.mxu0 0.0
      %526 = vmatpush1.msra.mxu0 0.0
      %527 = vmatprep.subr.mxu0 0.0
      %528 = vmatpush1.msra.mxu0 0.0
      %529 = vmatprep.subr.mxu0 0.0
      %530 = vmatpush1.msra.mxu0 0.0
      %531 = vmatprep.subr.mxu0 0.0
      %532 = vmatpush1.msra.mxu0 0.0
      %533 = vmatprep.subr.mxu0 0.0
      %534 = vmatpush1.msra.mxu0 0.0
      %535 = vmatprep.subr.mxu0 0.0
      %536 = vmatpush1.msra.mxu0 0.0
      %537 = vmatprep.subr.mxu0 0.0
      %538 = vmatpush1.msra.mxu0 0.0
      %539 = vmatprep.subr.mxu0 0.0
      %540 = vmatpush1.msra.mxu0 0.0
      %541 = vmatprep.subr.mxu0 0.0
      %542 = vmatpush1.msra.mxu0 0.0
      %543 = vmatprep.subr.mxu0 0.0
      %544 = vmatpush1.msra.mxu0 0.0
      %545 = vmatprep.subr.mxu0 0.0
      %546 = vmatpush1.msra.mxu0 0.0
      %547 = vmatprep.subr.mxu0 0.0
      %548 = vmatpush1.msra.mxu0 0.0
      %549 = vmatprep.subr.mxu0 0.0
      %550 = vmatpush1.msra.mxu0 0.0
      %551 = vmatprep.subr.mxu0 0.0
      %552 = vmatpush1.msra.mxu0 0.0
      %553 = vmatprep.subr.mxu0 0.0
      %554 = vmatpush1.msra.mxu0 0.0
      %555 = vmatprep.subr.mxu0 0.0
      %556 = vmatpush1.msra.mxu0 0.0
      %557 = vmatprep.subr.mxu0 0.0
      %558 = vmatpush1.msra.mxu0 0.0
      %559 = vmatprep.subr.mxu0 0.0
      %560 = vmatpush1.msra.mxu0 0.0
      %561 = vmatprep.subr.mxu0 0.0
      %562 = vmatpush1.msra.mxu0 0.0
      %563 = vmatprep.mubr.f32.mxu0 0.0
      %564 = vmatmul.mubr.f32.gmra.mrb[0].mxu0 %v472
      %v565 = vpop.f32.mrb[0].mxu0
      %v566 = vadd.f32 %v462, %v565
      %v567 = vpop.f32.mrb[0].mxu0
      %568 = vmatprep.mubr.f32.mxu0 0.0
      %569 = vmatmul.mubr.f32.gmra.mrb[0].mxu0 %v475
      %v570 = vpop.f32.mrb[0].mxu0
      %v571 = vadd.f32 %v463, %v570
      %v572 = vpop.f32.mrb[0].mxu0
      %573 = vmatprep.mubr.f32.mxu0 0.0
      %574 = vmatmul.mubr.f32.gmra.mrb[0].mxu0 %v478
      %v575 = vpop.f32.mrb[0].mxu0
      %v576 = vadd.f32 %v464, %v575
      %v577 = vpop.f32.mrb[0].mxu0
      %578 = vmatprep.mubr.f32.mxu0 0.0
      %579 = vmatmul.mubr.f32.gmra.mrb[0].mxu0 %v481
      %v580 = vpop.f32.mrb[0].mxu0
      %v581 = vadd.f32 %v465, %v580
      %v582 = vpop.f32.mrb[0].mxu0
      %583 = vmatprep.mubr.f32.mxu0 0.0
      %584 = vmatmul.mubr.f32.gmra.mrb[0].mxu0 %v484
      %v585 = vpop.f32.mrb[0].mxu0
      %v586 = vadd.f32 %v466, %v585
      %v587 = vpop.f32.mrb[0].mxu0
      %588 = vmatprep.mubr.f32.mxu0 0.0
      %589 = vmatmul.mubr.f32.gmra.mrb[0].mxu0 %v487
      %v590 = vpop.f32.mrb[0].mxu0
      %v591 = vadd.f32 %v467, %v590
      %v592 = vpop.f32.mrb[0].mxu0
      %593 = vmatprep.mubr.f32.mxu0 0.0
      %594 = vmatmul.mubr.f32.gmra.mrb[0].mxu0 %v490
      %v595 = vpop.f32.mrb[0].mxu0
      %v596 = vadd.f32 %v468, %v595
      %v597 = vpop.f32.mrb[0].mxu0
      %598 = vmatprep.mubr.f32.mxu0 0.0
      %599 = vmatmul.mubr.f32.gmra.mrb[0].mxu0 %v493
      %v600 = vpop.f32.mrb[0].mxu0
      %v601 = vadd.f32 %v469, %v600
      %v602 = vpop.f32.mrb[0].mxu0
      %603 = vdwg.mxu0
      %v604 = vsub.f32 0.0, %v566
      %v605 = vsub.f32 0.0, %v571
      %v606 = vsub.f32 0.0, %v576
      %v607 = vsub.f32 0.0, %v581
      %v608 = vsub.f32 0.0, %v586
      %v609 = vsub.f32 0.0, %v591
      %v610 = vsub.f32 0.0, %v596
      %v611 = vsub.f32 0.0, %v601
      %v612 = vmul.f32 %v604, 1.442695
      %v613 = vpow.pop %v612
      %v614 = vmul.f32 %v605, 1.442695
      %v615 = vpow.pop %v614
      %v616 = vmul.f32 %v606, 1.442695
      %v617 = vpow.pop %v616
      %v618 = vmul.f32 %v607, 1.442695
      %v619 = vpow.pop %v618
      %v620 = vmul.f32 %v608, 1.442695
      %v621 = vpow.pop %v620
      %v622 = vmul.f32 %v609, 1.442695
      %v623 = vpow.pop %v622
      %v624 = vmul.f32 %v610, 1.442695
      %v625 = vpow.pop %v624
      %v626 = vmul.f32 %v611, 1.442695
      %v627 = vpow.pop %v626
      %v628 = vadd.f32 %v613, 1.0
      %v629 = vadd.f32 %v615, 1.0
      %v630 = vadd.f32 %v617, 1.0
      %v631 = vadd.f32 %v619, 1.0
      %v632 = vadd.f32 %v621, 1.0
      %v633 = vadd.f32 %v623, 1.0
      %v634 = vadd.f32 %v625, 1.0
      %v635 = vadd.f32 %v627, 1.0
      %v636 = vrcp.pop %v628
      %v637 = vmul.f32 1.0, %v636
      %v638 = vrcp.pop %v629
      %v639 = vmul.f32 1.0, %v638
      %v640 = vrcp.pop %v630
      %v641 = vmul.f32 1.0, %v640
      %v642 = vrcp.pop %v631
      %v643 = vmul.f32 1.0, %v642
      %v644 = vrcp.pop %v632
      %v645 = vmul.f32 1.0, %v644
      %v646 = vrcp.pop %v633
      %v647 = vmul.f32 1.0, %v646
      %v648 = vrcp.pop %v634
      %v649 = vmul.f32 1.0, %v648
      %v650 = vrcp.pop %v635
      %v651 = vmul.f32 1.0, %v650
      %653 = vset.pattern.permute.xlu0 0
      %654 = vperm.xlu0 %653, %v637
      %v655 = vpop.permute.xlu0 %654
      %658 = vset.pattern.permute.xlu0 0
      %659 = vperm.xlu0 %658, %v639
      %v660 = vpop.permute.xlu0 %659
      %663 = vset.pattern.permute.xlu0 0
      %664 = vperm.xlu0 %663, %v641
      %v665 = vpop.permute.xlu0 %664
      %668 = vset.pattern.permute.xlu0 0
      %669 = vperm.xlu0 %668, %v643
      %v670 = vpop.permute.xlu0 %669
      %673 = vset.pattern.permute.xlu0 0
      %674 = vperm.xlu0 %673, %v645
      %v675 = vpop.permute.xlu0 %674
      %678 = vset.pattern.permute.xlu0 0
      %679 = vperm.xlu0 %678, %v647
      %v680 = vpop.permute.xlu0 %679
      %683 = vset.pattern.permute.xlu0 0
      %684 = vperm.xlu0 %683, %v649
      %v685 = vpop.permute.xlu0 %684
      %688 = vset.pattern.permute.xlu0 0
      %689 = vperm.xlu0 %688, %v651
      %v690 = vpop.permute.xlu0 %689
      %v692 = vmul.f32 %v225, %v655
      %v693 = vmul.f32 %v226, %v655
      %v694 = vmul.f32 %v227, %v660
      %v695 = vmul.f32 %v228, %v660
      %v696 = vmul.f32 %v229, %v665
      %v697 = vmul.f32 %v230, %v665
      %v698 = vmul.f32 %v231, %v670
      %v699 = vmul.f32 %v232, %v670
      %v700 = vmul.f32 %v233, %v675
      %v701 = vmul.f32 %v234, %v675
      %v702 = vmul.f32 %v235, %v680
      %v703 = vmul.f32 %v236, %v680
      %v704 = vmul.f32 %v237, %v685
      %v705 = vmul.f32 %v238, %v685
      %v706 = vmul.f32 %v239, %v690
      %v707 = vmul.f32 %v240, %v690
      %708 = vst [vmem:[%s224] sm:$0xff] %v692
      %709 = vst [vmem:[%s224 + $0x8] sm:$0xff] %v693
      %710 = vst [vmem:[%s224 + $0x10] sm:$0xff] %v694
      %711 = vst [vmem:[%s224 + $0x18] sm:$0xff] %v695
      %712 = vst [vmem:[%s224 + $0x20] sm:$0xff] %v696
      %713 = vst [vmem:[%s224 + $0x28] sm:$0xff] %v697
      %714 = vst [vmem:[%s224 + $0x30] sm:$0xff] %v698
      %715 = vst [vmem:[%s224 + $0x38] sm:$0xff] %v699
      %716 = vst [vmem:[%s224 + $0x40] sm:$0xff] %v700
      %717 = vst [vmem:[%s224 + $0x48] sm:$0xff] %v701
      %718 = vst [vmem:[%s224 + $0x50] sm:$0xff] %v702
      %719 = vst [vmem:[%s224 + $0x58] sm:$0xff] %v703
      %720 = vst [vmem:[%s224 + $0x60] sm:$0xff] %v704
      %721 = vst [vmem:[%s224 + $0x68] sm:$0xff] %v705
      %722 = vst [vmem:[%s224 + $0x70] sm:$0xff] %v706
      %723 = vst [vmem:[%s224 + $0x78] sm:$0xff] %v707
      %p724 = scmp.lt.s32.totalorder %s16, 1
      %s725 = scalar_select %p724, %s16, 1
      %s726 = smul.addr %s725, 16
      %s727 = smul.addr %s726, 8
      %s728 = scalar_lea.vmem %s5, %s727
      // Predicated region
      $region41: #{channel_attention.1} parent=39 // pred_check
        %p729 = pneg %p144
      $region42: #{channel_attention.1} parent=39 // pred_check_branch
        %731 = sbr.rel (%p729) target = $region44
      $region43: #{channel_attention.1} parent=39 // pred_region
        _
      $region44: #{channel_attention.1} parent=39 // pred_fallthru
        _
    $region40: #{channel_attention.1} parent=5 // pred_fallthru
      _
    %p732 = scmp.le.s32.totalorder 2, %s11
    // Predicated region
    $region45: #{channel_attention.1} parent=5 // pred_check
      %p733 = pneg %p732
    $region46: #{channel_attention.1} parent=5 // pred_check_branch
      %735 = sbr.rel (%p733) target = $region48
    $region47: #{channel_attention.1} parent=5 // pred_region
      %s736 = ssub.s32 %s11, 2
      // Predicated region
      $region49: #{channel_attention.1} parent=47 // pred_check
        %p737 = pneg %p150
      $region50: #{channel_attention.1} parent=47 // pred_check_branch
        %739 = sbr.rel (%p737) target = $region52
      $region51: #{channel_attention.1} parent=47 // pred_region
        %p740 = scmp.lt.s32.totalorder %s17, 1
        %s741 = scalar_select %p740, %s17, 1
        %s742 = smul.addr %s741, 16
        %s743 = smul.addr %s742, 8
        %s744 = scalar_lea.vmem %s5, %s743
      $region52: #{channel_attention.1} parent=47 // pred_fallthru
        _
    $region48: #{channel_attention.1} parent=5 // pred_fallthru
      _
  $region6: #{channel_attention.1} parent=0 // loop_footer
    %s15 = sadd.s32 1, %s11
  $region7: #{channel_attention.1} parent=0 // loop_footer_branch
    %10 = sbr.rel target = $region3
  $region8: #{channel_attention.1} parent=0 // loop_exit
    _

</llo_original>
